<compile_context>
chip_gen: v6e
topology: v6e:2x2x1
jax: 0.10.0
libtpu: 0.0.40
codegen_flags: <defaults>
</compile_context>

<pallas_src>
import functools

import jax
import jax.numpy as jnp
from jax.experimental import pallas as pl
from jax.experimental.pallas import tpu as pltpu


def _round_up(x, m):
    return (x + m - 1) // m * m


def _attention_kernel(out_ref, ctx_ref, wmt_ref, wot_ref, b_ref,
                      attended_ref, attn_ref, *, li, li_pad, d):
    out2d = out_ref[0]          # (TQ,  Dp)  input dtype
    ctx2d = ctx_ref[0]          # (Lip, Dp)  input dtype

    # scores = output @ context^T, contracting the feature dims directly so no
    # transposed copy of the context tile is ever materialized.
    scores = jax.lax.dot_general(
        out2d, ctx2d,
        dimension_numbers=(((1,), (1,)), ((), ())),
        preferred_element_type=jnp.float32)            # (TQ, Lip) f32

    # TODO(synk): optional self.mask (masked_fill_ with -inf) path is not
    # implemented; the module defaults to mask=None.

    if li_pad > li:
        # Mask key positions that only exist because of lane padding.
        col = jax.lax.broadcasted_iota(jnp.int32, scores.shape, 1)
        scores = jnp.where(col < li, scores, jnp.float32(-1e30))

    # Row-wise softmax over the (padded) input_len axis, f32 math.  The
    # reciprocal is exact (one divide per row, TQ divides total) because attn
    # is a user-visible output whose rows must sum to 1.
    m = jnp.max(scores, axis=-1, keepdims=True)
    e = jnp.exp(scores - m)
    denom = jnp.sum(e, axis=-1, keepdims=True)
    attn = e * (1.0 / denom)                            # (TQ, Lip) f32

    # mix = attn @ context -> (TQ, Dp); operands back in the input dtype.
    mix = jnp.dot(attn.astype(ctx2d.dtype), ctx2d,
                  preferred_element_type=jnp.float32)

    # linear_out([mix ; output]) with pre-transposed weight halves.
    lin = (jnp.dot(mix.astype(out2d.dtype), wmt_ref[...],
                   preferred_element_type=jnp.float32)
           + jnp.dot(out2d, wot_ref[...],
                     preferred_element_type=jnp.float32)
           + b_ref[...])                                # (TQ, Dp) f32

    # Store only the real (unpadded) feature / key columns; the tail vreg
    # stores are masked but we avoid a post-kernel HBM round trip.
    attended_ref[0] = jnp.tanh(lin[:, :d]).astype(attended_ref.dtype)
    attn_ref[0] = attn[:, :li].astype(attn_ref.dtype)


@jax.jit
def attention_forward(output, context, weight, bias):
    """output: (B, Lo, D), context: (B, Li, D), weight: (D, 2D), bias: (D,)."""
    B, Lo, D = output.shape
    _, Li, _ = context.shape
    dtype = output.dtype
    isz = jnp.dtype(dtype).itemsize

    # ---- tile / padding plan (lane = 128, sublane depends on dtype) --------
    Dp = _round_up(D, 128)
    Lip = _round_up(Li, 128)
    sub = 8 if isz == 4 else (16 if isz == 2 else 32)

    # Per-generation VMEM budget: ~75% of physical per-TC VMEM, capped at
    # 100 MiB (v5e/v6e have 128 MiB; v7x has 64 MiB -> ~48 MiB budget).
    try:
        phys_vmem = int(pltpu.get_tpu_info().vmem_capacity_bytes)
    except Exception:                                   # no TPU / older API
        phys_vmem = 64 * 2**20                          # conservative (v7x)
    budget = min(int(0.75 * phys_vmem), 100 * 2**20)

    def footprint(tq):
        # Explicit double-buffer accounting (2x per blocked operand/output)
        # plus live f32 temporaries (scores / e / attn + casts, mix, lin).
        fixed = (2 * Lip * Dp * isz        # context tile (constant over q)
                 + 4 * Dp * Dp * isz       # Wm.T + Wo.T
                 + 2 * Dp * 4)             # bias (f32)
        per_q = (2 * tq * Dp * isz         # output tile
                 + 2 * tq * D * isz        # attended out tile
                 + 2 * tq * Li * isz       # attn out tile
                 + 4 * tq * Lip * 4        # f32 scores / e / attn temporaries
                 + 2 * tq * Dp * 4)        # f32 mix / lin temporaries
        return fixed + per_q

    # Adaptive query tile: largest candidate whose footprint fits ~60% of the
    # budget (leaves headroom for Mosaic internal scratch / deeper buffering).
    TQ = sub
    for cand in (512, 256, 128, 64, 32, 16, 8):
        if cand >= sub and footprint(cand) <= int(0.6 * budget):
            TQ = cand
            break
    TQ = min(TQ, _round_up(Lo, sub))       # never bigger than Lo needs
    # v7x megacore: when B == 1 make sure the (parallel) q axis has >= 2 steps.
    if B == 1 and Lo > sub and _round_up(Lo, TQ) // TQ < 2:
        TQ = max(sub, _round_up(pl.cdiv(Lo, 2), sub))
    Lop = _round_up(Lo, TQ)
    n_q = Lop // TQ

    # ---- pad inputs to the tiled shapes (skipped when already aligned) -----
    def pad_to(x, shape):
        pads = [(0, t - s) for t, s in zip(shape, x.shape)]
        return jnp.pad(x, pads) if any(p for _, p in pads) else x

    out_p = pad_to(output, (B, Lop, Dp))
    ctx_p = pad_to(context, (B, Lip, Dp))

    # Split + pre-transpose the Linear(2D -> D) weight once on the host side.
    wm_t = pad_to(weight[:, :D].T, (Dp, Dp)).astype(dtype)   # acts on mix
    wo_t = pad_to(weight[:, D:].T, (Dp, Dp)).astype(dtype)   # acts on output
    b_p = pad_to(bias.reshape(1, D).astype(jnp.float32), (1, Dp))

    # NOTE: for very long contexts footprint(TQ) can exceed the budget since
    # the full (Lip, Dp) context tile is resident; flash-style KV streaming is
    # the follow-up for that regime (short/medium contexts covered here).
    vmem_limit = int(min(budget, max(32 * 2**20, int(1.25 * footprint(TQ)))))

    # ---- advisory cost estimate for XLA's scheduler -------------------------
    flops = (2 * B * Lop * Lip * Dp            # scores
             + 2 * B * Lop * Lip * Dp          # mix
             + 2 * B * Lop * Dp * (2 * Dp))    # linear_out
    transcendentals = B * Lop * (Lip + D)      # exp + tanh
    bytes_accessed = (isz * (B * Lop * Dp + B * Lip * Dp + 2 * Dp * Dp
                             + B * Lop * D + B * Lop * Li)
                      + 4 * Dp)

    grid_spec = pltpu.PrefetchScalarGridSpec(
        num_scalar_prefetch=0,
        grid=(B, n_q),
        in_specs=[
            pl.BlockSpec((1, TQ, Dp), lambda b, q: (b, q, 0)),    # output
            pl.BlockSpec((1, Lip, Dp), lambda b, q: (b, 0, 0)),   # context
            pl.BlockSpec((Dp, Dp), lambda b, q: (0, 0)),          # Wm.T
            pl.BlockSpec((Dp, Dp), lambda b, q: (0, 0)),          # Wo.T
            pl.BlockSpec((1, Dp), lambda b, q: (0, 0)),           # bias
        ],
        out_specs=[
            pl.BlockSpec((1, TQ, D), lambda b, q: (b, q, 0)),     # attended
            pl.BlockSpec((1, TQ, Li), lambda b, q: (b, q, 0)),    # attn
        ],
    )

    kernel = functools.partial(_attention_kernel, li=Li, li_pad=Lip, d=D)

    attended_p, attn_p = pl.pallas_call(
        kernel,
        out_shape=(
            jax.ShapeDtypeStruct((B, Lop, D), dtype),
            jax.ShapeDtypeStruct((B, Lop, Li), dtype),
        ),
        grid_spec=grid_spec,
        compiler_params=pltpu.CompilerParams(
            dimension_semantics=("parallel", "parallel"),
            vmem_limit_bytes=vmem_limit),
        cost_estimate=pl.CostEstimate(
            flops=flops,
            transcendentals=transcendentals,
            bytes_accessed=bytes_accessed),
    )(out_p, ctx_p, wm_t, wo_t, b_p)

    # Only padded query rows (if any) need stripping; feature / key dims are
    # emitted unpadded so the common case returns with zero extra copies.
    if Lop != Lo:
        attended_p = attended_p[:, :Lo]
        attn_p = attn_p[:, :Lo]
    return attended_p, attn_p


def _reference(output, context, weight, bias):
    # Pure-JAX reference mirroring the PyTorch forward (mask=None) at full
    # f32 precision so the comparison is against the exact result.
    hp = jax.lax.Precision.HIGHEST
    attn = jnp.einsum("bod,bid->boi", output, context, precision=hp)
    attn = jax.nn.softmax(attn, axis=-1)
    mix = jnp.einsum("boi,bid->bod", attn, context, precision=hp)
    combined = jnp.concatenate([mix, output], axis=-1)
    out = jnp.tanh(jnp.einsum("bok,dk->bod", combined, weight, precision=hp)
                   + bias)
    return out, attn


if __name__ == "__main__":
    key = jax.random.PRNGKey(0)
    B, Lo, Li, D = 2, 8, 8, 32

    k1, k2, k3, k4 = jax.random.split(key, 4)
    output = jax.random.normal(k1, (B, Lo, D), dtype=jnp.float32)
    context = jax.random.normal(k2, (B, Li, D), dtype=jnp.float32)

    # Deterministic init matching nn.Linear(2D, D): U(-1/sqrt(2D), 1/sqrt(2D))
    bound = 1.0 / jnp.sqrt(2.0 * D)
    weight = jax.random.uniform(k3, (D, 2 * D), jnp.float32, -bound, bound)
    bias = jax.random.uniform(k4, (D,), jnp.float32, -bound, bound)

    attended, attn = attention_forward(output, context, weight, bias)
    jax.block_until_ready((attended, attn))

    ref_out, ref_attn = _reference(output, context, weight, bias)
    # The kernel's MXU matmuls run at the backend's default f32 precision
    # (bf16-pass based on TPU), the reference at HIGHEST; both outputs are
    # bounded (tanh / softmax), so 2e-2 is a meaningful yet robust tolerance.
    assert jnp.allclose(attended, ref_out, atol=2e-2, rtol=2e-2)
    assert jnp.allclose(attn, ref_attn, atol=2e-2, rtol=2e-2)

    print("KERNEL_OK")
</pallas_src>

<mosaic_0001>
module attributes {stable_mosaic.version = 11 : i64} {
  func.func @_attention_kernel(%arg0: i32, %arg1: i32, %arg2: memref<1x8x128xf32, #tpu.memory_space<vmem>>, %arg3: memref<1x128x128xf32, #tpu.memory_space<vmem>>, %arg4: memref<128x128xf32, #tpu.memory_space<vmem>>, %arg5: memref<128x128xf32, #tpu.memory_space<vmem>>, %arg6: memref<1x128xf32, #tpu.memory_space<vmem>>, %arg7: memref<1x8x32xf32, #tpu.memory_space<vmem>>, %arg8: memref<1x8x8xf32, #tpu.memory_space<vmem>>) attributes {dimension_semantics = [#tpu.dimension_semantics<parallel>, #tpu.dimension_semantics<parallel>], iteration_bounds = array<i64: 2, 1>, scalar_prefetch = 0 : i64, scratch_operands = 0 : i64, tpu.core_type = #tpu.core_type<tc>, window_params = [{transform_indices = @transform_0, window_bounds = array<i64: 1, 8, 128>}, {transform_indices = @transform_1, window_bounds = array<i64: 1, 128, 128>}, {pipeline_mode = #tpu.pipeline_mode<synchronous>, transform_indices = @transform_2, window_bounds = array<i64: 128, 128>}, {pipeline_mode = #tpu.pipeline_mode<synchronous>, transform_indices = @transform_3, window_bounds = array<i64: 128, 128>}, {pipeline_mode = #tpu.pipeline_mode<synchronous>, transform_indices = @transform_4, window_bounds = array<i64: 1, 128>}, {transform_indices = @transform_5, window_bounds = array<i64: 1, 8, 32>}, {transform_indices = @transform_6, window_bounds = array<i64: 1, 8, 8>}]} {
    %c0 = arith.constant 0 : index
    %c0_0 = arith.constant 0 : index
    %c0_1 = arith.constant 0 : index
    %0 = vector.load %arg2[%c0, %c0_0, %c0_1] : memref<1x8x128xf32, #tpu.memory_space<vmem>>, vector<1x8x128xf32>
    %1 = vector.shape_cast %0 : vector<1x8x128xf32> to vector<8x128xf32>
    %c0_2 = arith.constant 0 : index
    %c0_3 = arith.constant 0 : index
    %c0_4 = arith.constant 0 : index
    %2 = vector.load %arg3[%c0_2, %c0_3, %c0_4] : memref<1x128x128xf32, #tpu.memory_space<vmem>>, vector<1x128x128xf32>
    %3 = vector.shape_cast %2 : vector<1x128x128xf32> to vector<128x128xf32>
    %cst = arith.constant dense<0.000000e+00> : vector<8x128xf32>
    %4 = tpu.matmul %1, %3, %cst {dimension_numbers = #tpu.dot_dimension_numbers<[1], [1], [0], [0], [0, 0, 1, 0], [], []>} : vector<8x128xf32>, vector<128x128xf32>, vector<8x128xf32> -> vector<8x128xf32>
    %5 = tpu.iota {dimensions = array<i32: 1>} : vector<8x128xi32>
    %c8_i32 = arith.constant 8 : i32
    %6 = vector.broadcast %c8_i32 : i32 to vector<8x128xi32>
    %7 = arith.cmpi slt, %5, %6 : vector<8x128xi32>
    %cst_5 = arith.constant -1.000000e+30 : f32
    %8 = vector.broadcast %cst_5 : f32 to vector<8x128xf32>
    %9 = arith.select %7, %4, %8 : vector<8x128xi1>, vector<8x128xf32>
    %cst_6 = arith.constant dense<0xFF800000> : vector<8xf32>
    %10 = vector.multi_reduction <maximumf>, %9, %cst_6 [1] : vector<8x128xf32> to vector<8xf32>
    %11 = vector.shape_cast %10 : vector<8xf32> to vector<8x1xf32>
    %12 = vector.broadcast %11 : vector<8x1xf32> to vector<8x128xf32>
    %13 = arith.subf %9, %12 : vector<8x128xf32>
    %14 = math.exp %13 : vector<8x128xf32>
    %cst_7 = arith.constant dense<0.000000e+00> : vector<8xf32>
    %15 = vector.multi_reduction <add>, %14, %cst_7 [1] : vector<8x128xf32> to vector<8xf32>
    %16 = vector.shape_cast %15 : vector<8xf32> to vector<8x1xf32>
    %cst_8 = arith.constant 1.000000e+00 : f32
    %17 = vector.broadcast %cst_8 : f32 to vector<8x1xf32>
    %18 = arith.divf %17, %16 : vector<8x1xf32>
    %19 = vector.broadcast %18 : vector<8x1xf32> to vector<8x128xf32>
    %20 = arith.mulf %14, %19 : vector<8x128xf32>
    %cst_9 = arith.constant dense<0.000000e+00> : vector<8x128xf32>
    %21 = tpu.matmul %20, %3, %cst_9 {dimension_numbers = #tpu.dot_dimension_numbers<[1], [0], [0], [1], [0, 0, 1, 1], [], []>} : vector<8x128xf32>, vector<128x128xf32>, vector<8x128xf32> -> vector<8x128xf32>
    %c0_10 = arith.constant 0 : index
    %c0_11 = arith.constant 0 : index
    %22 = vector.load %arg4[%c0_10, %c0_11] : memref<128x128xf32, #tpu.memory_space<vmem>>, vector<128x128xf32>
    %cst_12 = arith.constant dense<0.000000e+00> : vector<8x128xf32>
    %23 = tpu.matmul %21, %22, %cst_12 {dimension_numbers = #tpu.dot_dimension_numbers<[1], [0], [0], [1], [0, 0, 1, 1], [], []>} : vector<8x128xf32>, vector<128x128xf32>, vector<8x128xf32> -> vector<8x128xf32>
    %c0_13 = arith.constant 0 : index
    %c0_14 = arith.constant 0 : index
    %24 = vector.load %arg5[%c0_13, %c0_14] : memref<128x128xf32, #tpu.memory_space<vmem>>, vector<128x128xf32>
    %cst_15 = arith.constant dense<0.000000e+00> : vector<8x128xf32>
    %25 = tpu.matmul %1, %24, %cst_15 {dimension_numbers = #tpu.dot_dimension_numbers<[1], [0], [0], [1], [0, 0, 1, 1], [], []>} : vector<8x128xf32>, vector<128x128xf32>, vector<8x128xf32> -> vector<8x128xf32>
    %26 = arith.addf %23, %25 : vector<8x128xf32>
    %c0_16 = arith.constant 0 : index
    %c0_17 = arith.constant 0 : index
    %27 = vector.load %arg6[%c0_16, %c0_17] : memref<1x128xf32, #tpu.memory_space<vmem>>, vector<1x128xf32>
    %28 = vector.broadcast %27 : vector<1x128xf32> to vector<8x128xf32>
    %29 = arith.addf %26, %28 : vector<8x128xf32>
    %30 = vector.extract_strided_slice %29 {offsets = [0, 0], sizes = [8, 32], strides = [1, 1]} : vector<8x128xf32> to vector<8x32xf32>
    %31 = math.tanh %30 : vector<8x32xf32>
    %c0_18 = arith.constant 0 : index
    %c0_19 = arith.constant 0 : index
    %c0_20 = arith.constant 0 : index
    %32 = vector.load %arg7[%c0_18, %c0_19, %c0_20] : memref<1x8x32xf32, #tpu.memory_space<vmem>>, vector<1x8x32xf32>
    %33 = vector.shape_cast %32 : vector<1x8x32xf32> to vector<8x32xf32>
    %34 = vector.shape_cast %31 : vector<8x32xf32> to vector<1x8x32xf32>
    tpu.vector_store %arg7[%c0_18, %c0_19, %c0_20], %34 {strides = array<i32>} : memref<1x8x32xf32, #tpu.memory_space<vmem>>, vector<1x8x32xf32>,
    %35 = vector.extract_strided_slice %20 {offsets = [0, 0], sizes = [8, 8], strides = [1, 1]} : vector<8x128xf32> to vector<8x8xf32>
    %c0_21 = arith.constant 0 : index
    %c0_22 = arith.constant 0 : index
    %c0_23 = arith.constant 0 : index
    %36 = vector.load %arg8[%c0_21, %c0_22, %c0_23] : memref<1x8x8xf32, #tpu.memory_space<vmem>>, vector<1x8x8xf32>
    %37 = vector.shape_cast %36 : vector<1x8x8xf32> to vector<8x8xf32>
    %38 = vector.shape_cast %35 : vector<8x8xf32> to vector<1x8x8xf32>
    tpu.vector_store %arg8[%c0_21, %c0_22, %c0_23], %38 {strides = array<i32>} : memref<1x8x8xf32, #tpu.memory_space<vmem>>, vector<1x8x8xf32>,
    return
  }
  func.func @transform_0(%arg0: i32, %arg1: i32) -> (i32, i32, i32) {
    %c0_i32 = arith.constant 0 : i32
    %c0_i32_0 = arith.constant 0 : i32
    return %arg0, %arg1, %c0_i32 : i32, i32, i32
  }
  func.func @transform_1(%arg0: i32, %arg1: i32) -> (i32, i32, i32) {
    %c0_i32 = arith.constant 0 : i32
    %c0_i32_0 = arith.constant 0 : i32
    %c0_i32_1 = arith.constant 0 : i32
    return %arg0, %c0_i32, %c0_i32_0 : i32, i32, i32
  }
  func.func @transform_2(%arg0: i32, %arg1: i32) -> (i32, i32) {
    %c0_i32 = arith.constant 0 : i32
    %c0_i32_0 = arith.constant 0 : i32
    %c0_i32_1 = arith.constant 0 : i32
    return %c0_i32, %c0_i32_0 : i32, i32
  }
  func.func @transform_3(%arg0: i32, %arg1: i32) -> (i32, i32) {
    %c0_i32 = arith.constant 0 : i32
    %c0_i32_0 = arith.constant 0 : i32
    %c0_i32_1 = arith.constant 0 : i32
    return %c0_i32, %c0_i32_0 : i32, i32
  }
  func.func @transform_4(%arg0: i32, %arg1: i32) -> (i32, i32) {
    %c0_i32 = arith.constant 0 : i32
    %c0_i32_0 = arith.constant 0 : i32
    %c0_i32_1 = arith.constant 0 : i32
    return %c0_i32, %c0_i32_0 : i32, i32
  }
  func.func @transform_5(%arg0: i32, %arg1: i32) -> (i32, i32, i32) {
    %c0_i32 = arith.constant 0 : i32
    %c0_i32_0 = arith.constant 0 : i32
    return %arg0, %arg1, %c0_i32 : i32, i32, i32
  }
  func.func @transform_6(%arg0: i32, %arg1: i32) -> (i32, i32, i32) {
    %c0_i32 = arith.constant 0 : i32
    %c0_i32_0 = arith.constant 0 : i32
    return %arg0, %arg1, %c0_i32 : i32, i32, i32
  }
}

</mosaic_0001>

<llo_original>
// kernel: attention_forward.1
$region0: #{attention_forward.1}
  #allocation0 [shape = 'u32[]', space=smem, size = 0x4, offset = 0x4, fixed_abs, tag = 'smem constant byte address 0x4 - core index']
  #allocation1 [shape = 'u32[144,128]{1,0:T(1,128)}', space=vmem, size = 0x12000, scoped, tag = 'internal scratch']
  %s0 = inlined_call_operand.vmem [shape: f32[2,8,128], index: 0, kind: input, shape index: {}]
  %s1 = inlined_call_operand.vmem [shape: f32[2,128,128], index: 1, kind: input, shape index: {}]
  %s2 = inlined_call_operand.vmem [shape: f32[128,128], index: 2, kind: input, shape index: {}]
  %s3 = inlined_call_operand.vmem [shape: f32[128,128], index: 3, kind: input, shape index: {}]
  %s4 = inlined_call_operand.vmem [shape: f32[1,128], index: 4, kind: input, shape index: {}]
  %s5 = inlined_call_operand.hbm [shape: f32[2,8,32], index: 5, kind: output, shape index: {0}]
  %s6 = inlined_call_operand.hbm [shape: f32[2,8,8], index: 6, kind: output, shape index: {1}]
  %7 = xla_tuple %s5, %s6
  %s8 = sld [smem:[#allocation0]]
  $region61: #{attention_forward.1} parent=0
    _
  %s10 = ssub.s32 1, %s8
  %s11 = scalar_select 0, %s10, %s8
  $region1: #{attention_forward.1} parent=0
    #allocation2 [shape = 'u8[8192]{0}', space=vmem, size = 0x2000, scoped, tag = 'output window, operand 0']
    #allocation3 [shape = 's32[2]{0}', space=sflag, size = 0x8, scoped, tag = 'scoped memory for attention_forward.1']
    #allocation4 [shape = 'u8[8192]{0}', space=vmem, size = 0x2000, scoped, tag = 'output window, operand 1']
    #allocation5 [shape = 's32[2]{0}', space=sflag, size = 0x8, scoped, tag = 'scoped memory for attention_forward.1']
    %12 = vsyncpa [#allocation3], 0
    %s13 = scalar_lea.sflag [#allocation3], 1
    %14 = vsyncpa %s13, 0
    %15 = vsyncpa [#allocation5], 0
    %s16 = scalar_lea.sflag [#allocation5], 1
    %17 = vsyncpa %s16, 0
    loop: start=0, step=1, limit=4
    $region2: #{attention_forward.1} parent=1 // loop_pre_header
      _
    $region3: #{attention_forward.1} parent=1 // loop_header
      %s19 = sphi 0, %s23
      %p20 = scmp.ge.s32.totalorder %s19, 4
      %s26 = sphi 0, %s38
      %s27 = sphi 0, %s34
      %s28 = sphi 0, %s26
      %s29 = sphi 0, %s27
      %s30 = sphi 0, %s28
      %s31 = sphi 0, %s29
      %s43 = sphi 0, %s45
      %s46 = sphi 0, %s43
      %s47 = sphi 0, %s46
      %s63 = sphi 0, %s47
      %s69 = sphi 0, %s71
      %s72 = sphi 0, %s69
      %s73 = sphi 0, %s72
      %s89 = sphi 0, %s73
      %s93 = sphi 0, %s93
      %s95 = sphi 0, %s93
      %s96 = sphi 0, %s95
      %s110 = sphi 0, %s96
      %s114 = sphi 0, %s114
      %s116 = sphi 0, %s114
      %s117 = sphi 0, %s116
      %s131 = sphi 0, %s117
      %s135 = sphi 0, %s135
      %s137 = sphi 0, %s135
      %s138 = sphi 0, %s137
      %s152 = sphi 0, %s138
      %s160 = sphi 0, %s162
      %s163 = sphi 0, %s160
      %s164 = sphi 0, %s163
      %s180 = sphi 0, %s164
      %s188 = sphi 0, %s190
      %s191 = sphi 0, %s188
      %s192 = sphi 0, %s191
      %s208 = sphi 0, %s192
    $region4: #{attention_forward.1} parent=1 // loop_header_branch
      %22 = sbr.rel (%p20) target = $region8
    $region5: #{attention_forward.1} parent=1 // loop_body
      %s24 = ssub.s32 %s19, 1
      %s25 = ssub.s32 %s19, 2
      %s32 = sadd.s32 1, %s27
      %p33 = scmp.ge.s32.totalorder %s32, 1
      %s34 = scalar_select %p33, 0, %s32
      %s35 = sadd.s32 1, %s26
      %s36 = scalar_select %p33, %s35, %s26
      %p37 = scmp.ge.s32.totalorder %s36, 2
      %s38 = scalar_select %p37, 0, %s36
      %s39 = ssub.s32 %s26, %s38
      %s40 = ssub.s32 %s27, %s34
      %s41 = sor.u32 %s39, %s40
      %p42 = scmp.eq.s32.totalorder %s41, 0
      %s44 = sadd.s32 %s43, 1
      %s45 = scalar_select %p42, %s43, %s44
      %p48 = pneg %p42
      %p49 = scmp.eq.s32.totalorder %s19, 1
      %p50 = por %p48, %p49
      %p51 = scmp.ne.s32.totalorder %s43, %s46
      %p52 = scmp.eq.s32.totalorder %s19, 0
      %p53 = por %p51, %p52
      %p54 = scmp.ne.s32.totalorder %s43, %s46
      %p55 = scmp.eq.s32.totalorder %s24, 1
      %p56 = por %p54, %p55
      %p57 = scmp.ne.s32.totalorder %s46, %s47
      %p58 = scmp.eq.s32.totalorder %s24, 0
      %p59 = por %p57, %p58
      %p60 = scmp.ne.s32.totalorder %s46, %s47
      %p61 = scmp.eq.s32.totalorder %s25, 1
      %p62 = por %p60, %p61
      %p64 = scmp.ne.s32.totalorder %s47, %s63
      %p65 = scmp.eq.s32.totalorder %s25, 0
      %p66 = por %p64, %p65
      %s67 = ssub.s32 %s26, %s38
      %p68 = scmp.eq.s32.totalorder %s67, 0
      %s70 = sadd.s32 %s69, 1
      %s71 = scalar_select %p68, %s69, %s70
      %p74 = pneg %p68
      %p75 = scmp.eq.s32.totalorder %s19, 1
      %p76 = por %p74, %p75
      %p77 = scmp.ne.s32.totalorder %s69, %s72
      %p78 = scmp.eq.s32.totalorder %s19, 0
      %p79 = por %p77, %p78
      %p80 = scmp.ne.s32.totalorder %s69, %s72
      %p81 = scmp.eq.s32.totalorder %s24, 1
      %p82 = por %p80, %p81
      %p83 = scmp.ne.s32.totalorder %s72, %s73
      %p84 = scmp.eq.s32.totalorder %s24, 0
      %p85 = por %p83, %p84
      %p86 = scmp.ne.s32.totalorder %s72, %s73
      %p87 = scmp.eq.s32.totalorder %s25, 1
      %p88 = por %p86, %p87
      %p90 = scmp.ne.s32.totalorder %s73, %s89
      %p91 = scmp.eq.s32.totalorder %s25, 0
      %p92 = por %p90, %p91
      %s94 = sadd.s32 %s93, 1
      %p97 = scmp.eq.s32.totalorder %s19, 1
      %p98 = scmp.ne.s32.totalorder %s93, %s95
      %p99 = scmp.eq.s32.totalorder %s19, 0
      %p100 = por %p98, %p99
      %p101 = scmp.ne.s32.totalorder %s93, %s95
      %p102 = scmp.eq.s32.totalorder %s24, 1
      %p103 = por %p101, %p102
      %p104 = scmp.ne.s32.totalorder %s95, %s96
      %p105 = scmp.eq.s32.totalorder %s24, 0
      %p106 = por %p104, %p105
      %p107 = scmp.ne.s32.totalorder %s95, %s96
      %p108 = scmp.eq.s32.totalorder %s25, 1
      %p109 = por %p107, %p108
      %p111 = scmp.ne.s32.totalorder %s96, %s110
      %p112 = scmp.eq.s32.totalorder %s25, 0
      %p113 = por %p111, %p112
      %s115 = sadd.s32 %s114, 1
      %p118 = scmp.eq.s32.totalorder %s19, 1
      %p119 = scmp.ne.s32.totalorder %s114, %s116
      %p120 = scmp.eq.s32.totalorder %s19, 0
      %p121 = por %p119, %p120
      %p122 = scmp.ne.s32.totalorder %s114, %s116
      %p123 = scmp.eq.s32.totalorder %s24, 1
      %p124 = por %p122, %p123
      %p125 = scmp.ne.s32.totalorder %s116, %s117
      %p126 = scmp.eq.s32.totalorder %s24, 0
      %p127 = por %p125, %p126
      %p128 = scmp.ne.s32.totalorder %s116, %s117
      %p129 = scmp.eq.s32.totalorder %s25, 1
      %p130 = por %p128, %p129
      %p132 = scmp.ne.s32.totalorder %s117, %s131
      %p133 = scmp.eq.s32.totalorder %s25, 0
      %p134 = por %p132, %p133
      %s136 = sadd.s32 %s135, 1
      %p139 = scmp.eq.s32.totalorder %s19, 1
      %p140 = scmp.ne.s32.totalorder %s135, %s137
      %p141 = scmp.eq.s32.totalorder %s19, 0
      %p142 = por %p140, %p141
      %p143 = scmp.ne.s32.totalorder %s135, %s137
      %p144 = scmp.eq.s32.totalorder %s24, 1
      %p145 = por %p143, %p144
      %p146 = scmp.ne.s32.totalorder %s137, %s138
      %p147 = scmp.eq.s32.totalorder %s24, 0
      %p148 = por %p146, %p147
      %p149 = scmp.ne.s32.totalorder %s137, %s138
      %p150 = scmp.eq.s32.totalorder %s25, 1
      %p151 = por %p149, %p150
      %p153 = scmp.ne.s32.totalorder %s138, %s152
      %p154 = scmp.eq.s32.totalorder %s25, 0
      %p155 = por %p153, %p154
      %s156 = ssub.s32 %s26, %s38
      %s157 = ssub.s32 %s27, %s34
      %s158 = sor.u32 %s156, %s157
      %p159 = scmp.eq.s32.totalorder %s158, 0
      %s161 = sadd.s32 %s160, 1
      %s162 = scalar_select %p159, %s160, %s161
      %p165 = pneg %p159
      %p166 = scmp.eq.s32.totalorder %s19, 1
      %p167 = por %p165, %p166
      %p168 = scmp.ne.s32.totalorder %s160, %s163
      %p169 = scmp.eq.s32.totalorder %s19, 0
      %p170 = por %p168, %p169
      %p171 = scmp.ne.s32.totalorder %s160, %s163
      %p172 = scmp.eq.s32.totalorder %s24, 1
      %p173 = por %p171, %p172
      %p174 = scmp.ne.s32.totalorder %s163, %s164
      %p175 = scmp.eq.s32.totalorder %s24, 0
      %p176 = por %p174, %p175
      %p177 = scmp.ne.s32.totalorder %s163, %s164
      %p178 = scmp.eq.s32.totalorder %s25, 1
      %p179 = por %p177, %p178
      %p181 = scmp.ne.s32.totalorder %s164, %s180
      %p182 = scmp.eq.s32.totalorder %s25, 0
      %p183 = por %p181, %p182
      %s184 = ssub.s32 %s26, %s38
      %s185 = ssub.s32 %s27, %s34
      %s186 = sor.u32 %s184, %s185
      %p187 = scmp.eq.s32.totalorder %s186, 0
      %s189 = sadd.s32 %s188, 1
      %s190 = scalar_select %p187, %s188, %s189
      %p193 = pneg %p187
      %p194 = scmp.eq.s32.totalorder %s19, 1
      %p195 = por %p193, %p194
      %p196 = scmp.ne.s32.totalorder %s188, %s191
      %p197 = scmp.eq.s32.totalorder %s19, 0
      %p198 = por %p196, %p197
      %p199 = scmp.ne.s32.totalorder %s188, %s191
      %p200 = scmp.eq.s32.totalorder %s24, 1
      %p201 = por %p199, %p200
      %p202 = scmp.ne.s32.totalorder %s191, %s192
      %p203 = scmp.eq.s32.totalorder %s24, 0
      %p204 = por %p202, %p203
      %p205 = scmp.ne.s32.totalorder %s191, %s192
      %p206 = scmp.eq.s32.totalorder %s25, 1
      %p207 = por %p205, %p206
      %p209 = scmp.ne.s32.totalorder %s192, %s208
      %p210 = scmp.eq.s32.totalorder %s25, 0
      %p211 = por %p209, %p210
      %p212 = scmp.le.s32.totalorder 1, %s19
      %p213 = scmp.lt.s32.totalorder %s19, 3
      %p214 = pnand %p212, %p213
      %p215 = pneg %p214
      // Predicated region
      $region9: #{attention_forward.1} parent=5 // pred_check
        _
      $region10: #{attention_forward.1} parent=5 // pred_check_branch
        %217 = sbr.rel (%p214) target = $region12
      $region11: #{attention_forward.1} parent=5 // pred_region
        %s218 = ssub.s32 %s19, 1
        // Predicated region
        $region13: #{attention_forward.1} parent=11 // pred_check
          %p219 = pneg %p106
        $region14: #{attention_forward.1} parent=11 // pred_check_branch
          %221 = sbr.rel (%p219) target = $region16
        $region15: #{attention_forward.1} parent=11 // pred_region
          _
        $region16: #{attention_forward.1} parent=11 // pred_fallthru
          _
        // Predicated region
        $region17: #{attention_forward.1} parent=11 // pred_check
          %p222 = pneg %p127
        $region18: #{attention_forward.1} parent=11 // pred_check_branch
          %224 = sbr.rel (%p222) target = $region20
        $region19: #{attention_forward.1} parent=11 // pred_region
          _
        $region20: #{attention_forward.1} parent=11 // pred_fallthru
          _
        // Predicated region
        $region21: #{attention_forward.1} parent=11 // pred_check
          %p225 = pneg %p148
        $region22: #{attention_forward.1} parent=11 // pred_check_branch
          %227 = sbr.rel (%p225) target = $region24
        $region23: #{attention_forward.1} parent=11 // pred_region
          _
        $region24: #{attention_forward.1} parent=11 // pred_fallthru
          _
      $region12: #{attention_forward.1} parent=5 // pred_fallthru
        _
      %p228 = scmp.lt.s32.totalorder %s19, 2
      // Predicated region
      $region25: #{attention_forward.1} parent=5 // pred_check
        %p229 = pneg %p228
      $region26: #{attention_forward.1} parent=5 // pred_check_branch
        %231 = sbr.rel (%p229) target = $region28
      $region27: #{attention_forward.1} parent=5 // pred_region
        // Predicated region
        $region29: #{attention_forward.1} parent=27 // pred_check
          %p232 = pneg %p53
        $region30: #{attention_forward.1} parent=27 // pred_check_branch
          %234 = sbr.rel (%p232) target = $region32
        $region31: #{attention_forward.1} parent=27 // pred_region
          %p235 = scmp.lt.s32.totalorder %s26, 1
          %s236 = scalar_select %p235, %s26, 1
          %p237 = scmp.lt.s32.totalorder %s27, 0
          %s238 = scalar_select %p237, %s27, 0
          %s239 = sadd.s32 %s238, %s236
          %s240 = smul.addr %s239, 8
          %s241 = scalar_lea.vmem %s0, %s240
        $region32: #{attention_forward.1} parent=27 // pred_fallthru
          _
        // Predicated region
        $region33: #{attention_forward.1} parent=27 // pred_check
          %p242 = pneg %p79
        $region34: #{attention_forward.1} parent=27 // pred_check_branch
          %244 = sbr.rel (%p242) target = $region36
        $region35: #{attention_forward.1} parent=27 // pred_region
          %p245 = scmp.lt.s32.totalorder %s26, 1
          %s246 = scalar_select %p245, %s26, 1
          %s247 = smul.addr %s246, 16
          %s248 = smul.addr %s247, 8
          %s249 = scalar_lea.vmem %s1, %s248
        $region36: #{attention_forward.1} parent=27 // pred_fallthru
          _
      $region28: #{attention_forward.1} parent=5 // pred_fallthru
        _
      %p250 = scmp.le.s32.totalorder 1, %s19
      %p251 = scmp.lt.s32.totalorder %s19, 3
      %p252 = pnand %p250, %p251
      %p253 = pneg %p252
      // Predicated region
      $region37: #{attention_forward.1} parent=5 // pred_check
        _
      $region38: #{attention_forward.1} parent=5 // pred_check_branch
        %255 = sbr.rel (%p252) target = $region40
      $region39: #{attention_forward.1} parent=5 // pred_region
        %s256 = ssub.s32 %s19, 1
        %p257 = scmp.lt.s32.totalorder %s28, 1
        %s258 = scalar_select %p257, %s28, 1
        %p259 = scmp.lt.s32.totalorder %s29, 0
        %s260 = scalar_select %p259, %s29, 0
        %s261 = sadd.s32 %s260, %s258
        %s262 = smul.addr %s261, 8
        %s263 = scalar_lea.vmem %s0, %s262
        %p264 = pneg %p59
        %p265 = pneg %p56
        %p266 = scmp.lt.s32.totalorder %s28, 1
        %s267 = scalar_select %p266, %s28, 1
        %s268 = smul.addr %s267, 16
        %s269 = smul.addr %s268, 8
        %s270 = scalar_lea.vmem %s1, %s269
        %p271 = pneg %p85
        %p272 = pneg %p82
        %p273 = pneg %p106
        %p274 = pneg %p103
        %p275 = pneg %p127
        %p276 = pneg %p124
        %p277 = pneg %p148
        %p278 = pneg %p145
        %p279 = pneg %p176
        %p280 = pneg %p173
        %s281 = sand.u32 %s163, 1
        %s282 = scalar_lea.sflag [#allocation3], %s281
        %s283 = sand.u32 %s163, 1
        %s284 = smul.addr %s283, 8
        %s285 = scalar_lea.vmem [#allocation2], %s284
        %p286 = pneg %p204
        %p287 = pneg %p201
        %s288 = sand.u32 %s191, 1
        %s289 = scalar_lea.sflag [#allocation5], %s288
        %s290 = sand.u32 %s191, 1
        %s291 = smul.addr %s290, 8
        %s292 = scalar_lea.vmem [#allocation4], %s291
        %p293 = scmp.lt.s32.totalorder %s28, 1
        %s294 = scalar_select %p293, %s28, 1
        %p295 = scmp.lt.s32.totalorder %s29, 0
        %s296 = scalar_select %p295, %s29, 0
        %s297 = sadd.s32 %s296, %s294
        %s298 = smul.addr %s297, 8
        %s299 = scalar_lea.vmem %s0, %s298
        %p300 = scmp.lt.s32.totalorder %s28, 1
        %s301 = scalar_select %p300, %s28, 1
        %s302 = smul.addr %s301, 16
        %s303 = smul.addr %s302, 8
        %s304 = scalar_lea.vmem %s1, %s303
        %v305 = vld [vmem:[%s299] sm:$0xff]
        %v306 = vld [vmem:[%s304] sm:$0xff]
        %v307 = vld [vmem:[%s304 + $0x8] sm:$0xff]
        %v308 = vld [vmem:[%s304 + $0x10] sm:$0xff]
        %v309 = vld [vmem:[%s304 + $0x18] sm:$0xff]
        %v310 = vld [vmem:[%s304 + $0x20] sm:$0xff]
        %v311 = vld [vmem:[%s304 + $0x28] sm:$0xff]
        %v312 = vld [vmem:[%s304 + $0x30] sm:$0xff]
        %v313 = vld [vmem:[%s304 + $0x38] sm:$0xff]
        %v314 = vld [vmem:[%s304 + $0x40] sm:$0xff]
        %v315 = vld [vmem:[%s304 + $0x48] sm:$0xff]
        %v316 = vld [vmem:[%s304 + $0x50] sm:$0xff]
        %v317 = vld [vmem:[%s304 + $0x58] sm:$0xff]
        %v318 = vld [vmem:[%s304 + $0x60] sm:$0xff]
        %v319 = vld [vmem:[%s304 + $0x68] sm:$0xff]
        %v320 = vld [vmem:[%s304 + $0x70] sm:$0xff]
        %v321 = vld [vmem:[%s304 + $0x78] sm:$0xff]
        %322 = vmatprep.subr.mxu0 0.0
        %323 = vmatpush1.xpose.msra.mxu0 %v321
        %324 = vmatprep.subr.mxu0 0.0
        %325 = vmatpush1.xpose.msra.mxu0 %v320
        %326 = vmatprep.subr.mxu0 0.0
        %327 = vmatpush1.xpose.msra.mxu0 %v319
        %328 = vmatprep.subr.mxu0 0.0
        %329 = vmatpush1.xpose.msra.mxu0 %v318
        %330 = vmatprep.subr.mxu0 0.0
        %331 = vmatpush1.xpose.msra.mxu0 %v317
        %332 = vmatprep.subr.mxu0 0.0
        %333 = vmatpush1.xpose.msra.mxu0 %v316
        %334 = vmatprep.subr.mxu0 0.0
        %335 = vmatpush1.xpose.msra.mxu0 %v315
        %336 = vmatprep.subr.mxu0 0.0
        %337 = vmatpush1.xpose.msra.mxu0 %v314
        %338 = vmatprep.subr.mxu0 0.0
        %339 = vmatpush1.xpose.msra.mxu0 %v313
        %340 = vmatprep.subr.mxu0 0.0
        %341 = vmatpush1.xpose.msra.mxu0 %v312
        %342 = vmatprep.subr.mxu0 0.0
        %343 = vmatpush1.xpose.msra.mxu0 %v311
        %344 = vmatprep.subr.mxu0 0.0
        %345 = vmatpush1.xpose.msra.mxu0 %v310
        %346 = vmatprep.subr.mxu0 0.0
        %347 = vmatpush1.xpose.msra.mxu0 %v309
        %348 = vmatprep.subr.mxu0 0.0
        %349 = vmatpush1.xpose.msra.mxu0 %v308
        %350 = vmatprep.subr.mxu0 0.0
        %351 = vmatpush1.xpose.msra.mxu0 %v307
        %352 = vmatprep.subr.mxu0 0.0
        %353 = vmatpush1.xpose.msra.mxu0 %v306
        %354 = vmatprep.subr.mxu0 0.0
        %355 = vmatpush2.xpose.msra.mxu0 0.0
        %356 = vmatprep.subr.mxu0 0.0
        %357 = vmatpush2.xpose.msra.mxu0 0.0
        %358 = vmatprep.subr.mxu0 0.0
        %359 = vmatpush2.xpose.msra.mxu0 0.0
        %360 = vmatprep.subr.mxu0 0.0
        %361 = vmatpush2.xpose.msra.mxu0 0.0
        %362 = vmatprep.subr.mxu0 0.0
        %363 = vmatpush2.xpose.msra.mxu0 0.0
        %364 = vmatprep.subr.mxu0 0.0
        %365 = vmatpush2.xpose.msra.mxu0 0.0
        %366 = vmatprep.subr.mxu0 0.0
        %367 = vmatpush2.xpose.msra.mxu0 0.0
        %368 = vmatprep.subr.mxu0 0.0
        %369 = vmatpush2.xpose.msra.mxu0 0.0
        %370 = vmatprep.subr.mxu0 0.0
        %371 = vmatpush2.xpose.msra.mxu0 0.0
        %372 = vmatprep.subr.mxu0 0.0
        %373 = vmatpush2.xpose.msra.mxu0 0.0
        %374 = vmatprep.subr.mxu0 0.0
        %375 = vmatpush2.xpose.msra.mxu0 0.0
        %376 = vmatprep.subr.mxu0 0.0
        %377 = vmatpush2.xpose.msra.mxu0 0.0
        %378 = vmatprep.subr.mxu0 0.0
        %379 = vmatpush2.xpose.msra.mxu0 0.0
        %380 = vmatprep.subr.mxu0 0.0
        %381 = vmatpush2.xpose.msra.mxu0 0.0
        %382 = vmatprep.subr.mxu0 0.0
        %383 = vmatpush2.xpose.msra.mxu0 0.0
        %384 = vmatprep.subr.mxu0 0.0
        %385 = vmatpush2.xpose.msra.mxu0 0.0
        %386 = vmatprep.mubr.f32.mxu0 0.0
        %387 = vmatmul.mubr.f32.gmra.mxu0 %v305
        %v388 = vpop.f32.mrf.mxu0
        %v389 = vadd.f32 0.0, %v388
        %v390 = vpop.f32.mrf.mxu0
        %391 = vdwg.mxu0
        %v392 = vlaneseq
        %v393 = vand.u32 %v392, 127
        %vm394 = vcmp.lt.s32.totalorder %v393, 8
        %v395 = vsel %vm394, %v389, -1e+30
        %396 = vmax.xlane.f32.xlu0 %v395
        %v397 = vpop.xlane.xlu0 %396
        %v398 = vsub.f32 %v395, %v397
        %v399 = vmul.f32 %v398, 1.442695
        %v400 = vpow.pop %v399
        %401 = vadd.xlane.f32.xlu0 %v400
        %v402 = vpop.xlane.xlu0 %401
        %v403 = vrcp.pop %v402
        %v404 = vmul.f32 1.0, %v403
        %v405 = vmul.f32 %v400, %v404
        %406 = vmatprep.subr.mxu0 0.0
        %407 = vmatpush1.msra.mxu0 %v321
        %408 = vmatprep.subr.mxu0 0.0
        %409 = vmatpush1.msra.mxu0 %v320
        %410 = vmatprep.subr.mxu0 0.0
        %411 = vmatpush1.msra.mxu0 %v319
        %412 = vmatprep.subr.mxu0 0.0
        %413 = vmatpush1.msra.mxu0 %v318
        %414 = vmatprep.subr.mxu0 0.0
        %415 = vmatpush1.msra.mxu0 %v317
        %416 = vmatprep.subr.mxu0 0.0
        %417 = vmatpush1.msra.mxu0 %v316
        %418 = vmatprep.subr.mxu0 0.0
        %419 = vmatpush1.msra.mxu0 %v315
        %420 = vmatprep.subr.mxu0 0.0
        %421 = vmatpush1.msra.mxu0 %v314
        %422 = vmatprep.subr.mxu0 0.0
        %423 = vmatpush1.msra.mxu0 %v313
        %424 = vmatprep.subr.mxu0 0.0
        %425 = vmatpush1.msra.mxu0 %v312
        %426 = vmatprep.subr.mxu0 0.0
        %427 = vmatpush1.msra.mxu0 %v311
        %428 = vmatprep.subr.mxu0 0.0
        %429 = vmatpush1.msra.mxu0 %v310
        %430 = vmatprep.subr.mxu0 0.0
        %431 = vmatpush1.msra.mxu0 %v309
        %432 = vmatprep.subr.mxu0 0.0
        %433 = vmatpush1.msra.mxu0 %v308
        %434 = vmatprep.subr.mxu0 0.0
        %435 = vmatpush1.msra.mxu0 %v307
        %436 = vmatprep.subr.mxu0 0.0
        %437 = vmatpush1.msra.mxu0 %v306
        %438 = vmatprep.subr.mxu0 0.0
        %439 = vmatpush2.msra.mxu0 0.0
        %440 = vmatprep.subr.mxu0 0.0
        %441 = vmatpush2.msra.mxu0 0.0
        %442 = vmatprep.subr.mxu0 0.0
        %443 = vmatpush2.msra.mxu0 0.0
        %444 = vmatprep.subr.mxu0 0.0
        %445 = vmatpush2.msra.mxu0 0.0
        %446 = vmatprep.subr.mxu0 0.0
        %447 = vmatpush2.msra.mxu0 0.0
        %448 = vmatprep.subr.mxu0 0.0
        %449 = vmatpush2.msra.mxu0 0.0
        %450 = vmatprep.subr.mxu0 0.0
        %451 = vmatpush2.msra.mxu0 0.0
        %452 = vmatprep.subr.mxu0 0.0
        %453 = vmatpush2.msra.mxu0 0.0
        %454 = vmatprep.subr.mxu0 0.0
        %455 = vmatpush2.msra.mxu0 0.0
        %456 = vmatprep.subr.mxu0 0.0
        %457 = vmatpush2.msra.mxu0 0.0
        %458 = vmatprep.subr.mxu0 0.0
        %459 = vmatpush2.msra.mxu0 0.0
        %460 = vmatprep.subr.mxu0 0.0
        %461 = vmatpush2.msra.mxu0 0.0
        %462 = vmatprep.subr.mxu0 0.0
        %463 = vmatpush2.msra.mxu0 0.0
        %464 = vmatprep.subr.mxu0 0.0
        %465 = vmatpush2.msra.mxu0 0.0
        %466 = vmatprep.subr.mxu0 0.0
        %467 = vmatpush2.msra.mxu0 0.0
        %468 = vmatprep.subr.mxu0 0.0
        %469 = vmatpush2.msra.mxu0 0.0
        %470 = vmatprep.mubr.f32.mxu0 0.0
        %471 = vmatmul.mubr.f32.gmra.mxu0 %v405
        %v472 = vpop.f32.mrf.mxu0
        %v473 = vadd.f32 0.0, %v472
        %v474 = vpop.f32.mrf.mxu0
        %475 = vdwg.mxu0
        %v476 = vld [vmem:[%s2] sm:$0xff]
        %v477 = vld [vmem:[%s2 + $0x8] sm:$0xff]
        %v478 = vld [vmem:[%s2 + $0x10] sm:$0xff]
        %v479 = vld [vmem:[%s2 + $0x18] sm:$0xff]
        %v480 = vld [vmem:[%s2 + $0x20] sm:$0xff]
        %v481 = vld [vmem:[%s2 + $0x28] sm:$0xff]
        %v482 = vld [vmem:[%s2 + $0x30] sm:$0xff]
        %v483 = vld [vmem:[%s2 + $0x38] sm:$0xff]
        %v484 = vld [vmem:[%s2 + $0x40] sm:$0xff]
        %v485 = vld [vmem:[%s2 + $0x48] sm:$0xff]
        %v486 = vld [vmem:[%s2 + $0x50] sm:$0xff]
        %v487 = vld [vmem:[%s2 + $0x58] sm:$0xff]
        %v488 = vld [vmem:[%s2 + $0x60] sm:$0xff]
        %v489 = vld [vmem:[%s2 + $0x68] sm:$0xff]
        %v490 = vld [vmem:[%s2 + $0x70] sm:$0xff]
        %v491 = vld [vmem:[%s2 + $0x78] sm:$0xff]
        %v492 = vld [vmem:[%s3] sm:$0xff]
        %v493 = vld [vmem:[%s3 + $0x8] sm:$0xff]
        %v494 = vld [vmem:[%s3 + $0x10] sm:$0xff]
        %v495 = vld [vmem:[%s3 + $0x18] sm:$0xff]
        %v496 = vld [vmem:[%s3 + $0x20] sm:$0xff]
        %v497 = vld [vmem:[%s3 + $0x28] sm:$0xff]
        %v498 = vld [vmem:[%s3 + $0x30] sm:$0xff]
        %v499 = vld [vmem:[%s3 + $0x38] sm:$0xff]
        %v500 = vld [vmem:[%s3 + $0x40] sm:$0xff]
        %v501 = vld [vmem:[%s3 + $0x48] sm:$0xff]
        %v502 = vld [vmem:[%s3 + $0x50] sm:$0xff]
        %v503 = vld [vmem:[%s3 + $0x58] sm:$0xff]
        %v504 = vld [vmem:[%s3 + $0x60] sm:$0xff]
        %v505 = vld [vmem:[%s3 + $0x68] sm:$0xff]
        %v506 = vld [vmem:[%s3 + $0x70] sm:$0xff]
        %v507 = vld [vmem:[%s3 + $0x78] sm:$0xff]
        %508 = vmatprep.subr.mxu0 0.0
        %509 = vmatpush1.msra.mxu0 %v507
        %510 = vmatprep.subr.mxu0 0.0
        %511 = vmatpush1.msra.mxu0 %v506
        %512 = vmatprep.subr.mxu0 0.0
        %513 = vmatpush1.msra.mxu0 %v505
        %514 = vmatprep.subr.mxu0 0.0
        %515 = vmatpush1.msra.mxu0 %v504
        %516 = vmatprep.subr.mxu0 0.0
        %517 = vmatpush1.msra.mxu0 %v503
        %518 = vmatprep.subr.mxu0 0.0
        %519 = vmatpush1.msra.mxu0 %v502
        %520 = vmatprep.subr.mxu0 0.0
        %521 = vmatpush1.msra.mxu0 %v501
        %522 = vmatprep.subr.mxu0 0.0
        %523 = vmatpush1.msra.mxu0 %v500
        %524 = vmatprep.subr.mxu0 0.0
        %525 = vmatpush1.msra.mxu0 %v499
        %526 = vmatprep.subr.mxu0 0.0
        %527 = vmatpush1.msra.mxu0 %v498
        %528 = vmatprep.subr.mxu0 0.0
        %529 = vmatpush1.msra.mxu0 %v497
        %530 = vmatprep.subr.mxu0 0.0
        %531 = vmatpush1.msra.mxu0 %v496
        %532 = vmatprep.subr.mxu0 0.0
        %533 = vmatpush1.msra.mxu0 %v495
        %534 = vmatprep.subr.mxu0 0.0
        %535 = vmatpush1.msra.mxu0 %v494
        %536 = vmatprep.subr.mxu0 0.0
        %537 = vmatpush1.msra.mxu0 %v493
        %538 = vmatprep.subr.mxu0 0.0
        %539 = vmatpush1.msra.mxu0 %v492
        %540 = vmatprep.subr.mxu0 0.0
        %541 = vmatpush2.msra.mxu0 0.0
        %542 = vmatprep.subr.mxu0 0.0
        %543 = vmatpush2.msra.mxu0 0.0
        %544 = vmatprep.subr.mxu0 0.0
        %545 = vmatpush2.msra.mxu0 0.0
        %546 = vmatprep.subr.mxu0 0.0
        %547 = vmatpush2.msra.mxu0 0.0
        %548 = vmatprep.subr.mxu0 0.0
        %549 = vmatpush2.msra.mxu0 0.0
        %550 = vmatprep.subr.mxu0 0.0
        %551 = vmatpush2.msra.mxu0 0.0
        %552 = vmatprep.subr.mxu0 0.0
        %553 = vmatpush2.msra.mxu0 0.0
        %554 = vmatprep.subr.mxu0 0.0
        %555 = vmatpush2.msra.mxu0 0.0
        %556 = vmatprep.subr.mxu0 0.0
        %557 = vmatpush2.msra.mxu0 0.0
        %558 = vmatprep.subr.mxu0 0.0
        %559 = vmatpush2.msra.mxu0 0.0
        %560 = vmatprep.subr.mxu0 0.0
        %561 = vmatpush2.msra.mxu0 0.0
        %562 = vmatprep.subr.mxu0 0.0
        %563 = vmatpush2.msra.mxu0 0.0
        %564 = vmatprep.subr.mxu0 0.0
        %565 = vmatpush2.msra.mxu0 0.0
        %566 = vmatprep.subr.mxu0 0.0
        %567 = vmatpush2.msra.mxu0 0.0
        %568 = vmatprep.subr.mxu0 0.0
        %569 = vmatpush2.msra.mxu0 0.0
        %570 = vmatprep.subr.mxu0 0.0
        %571 = vmatpush2.msra.mxu0 0.0
        %572 = vmatprep.mubr.f32.mxu0 0.0
        %573 = vmatmul.mubr.f32.gmra.mxu0 %v305
        %v574 = vpop.f32.mrf.mxu0
        %v575 = vadd.f32 0.0, %v574
        %v576 = vpop.f32.mrf.mxu0
        %577 = vdwg.mxu0
        %578 = vmatprep.subr.mxu0 0.0
        %579 = vmatpush1.msra.mxu0 %v491
        %580 = vmatprep.subr.mxu0 0.0
        %581 = vmatpush1.msra.mxu0 %v490
        %582 = vmatprep.subr.mxu0 0.0
        %583 = vmatpush1.msra.mxu0 %v489
        %584 = vmatprep.subr.mxu0 0.0
        %585 = vmatpush1.msra.mxu0 %v488
        %586 = vmatprep.subr.mxu0 0.0
        %587 = vmatpush1.msra.mxu0 %v487
        %588 = vmatprep.subr.mxu0 0.0
        %589 = vmatpush1.msra.mxu0 %v486
        %590 = vmatprep.subr.mxu0 0.0
        %591 = vmatpush1.msra.mxu0 %v485
        %592 = vmatprep.subr.mxu0 0.0
        %593 = vmatpush1.msra.mxu0 %v484
        %594 = vmatprep.subr.mxu0 0.0
        %595 = vmatpush1.msra.mxu0 %v483
        %596 = vmatprep.subr.mxu0 0.0
        %597 = vmatpush1.msra.mxu0 %v482
        %598 = vmatprep.subr.mxu0 0.0
        %599 = vmatpush1.msra.mxu0 %v481
        %600 = vmatprep.subr.mxu0 0.0
        %601 = vmatpush1.msra.mxu0 %v480
        %602 = vmatprep.subr.mxu0 0.0
        %603 = vmatpush1.msra.mxu0 %v479
        %604 = vmatprep.subr.mxu0 0.0
        %605 = vmatpush1.msra.mxu0 %v478
        %606 = vmatprep.subr.mxu0 0.0
        %607 = vmatpush1.msra.mxu0 %v477
        %608 = vmatprep.subr.mxu0 0.0
        %609 = vmatpush1.msra.mxu0 %v476
        %610 = vmatprep.subr.mxu0 0.0
        %611 = vmatpush2.msra.mxu0 0.0
        %612 = vmatprep.subr.mxu0 0.0
        %613 = vmatpush2.msra.mxu0 0.0
        %614 = vmatprep.subr.mxu0 0.0
        %615 = vmatpush2.msra.mxu0 0.0
        %616 = vmatprep.subr.mxu0 0.0
        %617 = vmatpush2.msra.mxu0 0.0
        %618 = vmatprep.subr.mxu0 0.0
        %619 = vmatpush2.msra.mxu0 0.0
        %620 = vmatprep.subr.mxu0 0.0
        %621 = vmatpush2.msra.mxu0 0.0
        %622 = vmatprep.subr.mxu0 0.0
        %623 = vmatpush2.msra.mxu0 0.0
        %624 = vmatprep.subr.mxu0 0.0
        %625 = vmatpush2.msra.mxu0 0.0
        %626 = vmatprep.subr.mxu0 0.0
        %627 = vmatpush2.msra.mxu0 0.0
        %628 = vmatprep.subr.mxu0 0.0
        %629 = vmatpush2.msra.mxu0 0.0
        %630 = vmatprep.subr.mxu0 0.0
        %631 = vmatpush2.msra.mxu0 0.0
        %632 = vmatprep.subr.mxu0 0.0
        %633 = vmatpush2.msra.mxu0 0.0
        %634 = vmatprep.subr.mxu0 0.0
        %635 = vmatpush2.msra.mxu0 0.0
        %636 = vmatprep.subr.mxu0 0.0
        %637 = vmatpush2.msra.mxu0 0.0
        %638 = vmatprep.subr.mxu0 0.0
        %639 = vmatpush2.msra.mxu0 0.0
        %640 = vmatprep.subr.mxu0 0.0
        %641 = vmatpush2.msra.mxu0 0.0
        %642 = vmatprep.mubr.f32.mxu0 0.0
        %643 = vmatmul.mubr.f32.gmra.mxu0 %v473
        %v644 = vpop.f32.mrf.mxu0
        %v645 = vadd.f32 %v575, %v644
        %v646 = vpop.f32.mrf.mxu0
        %647 = vdwg.mxu0
        %v648 = vld [vmem:[%s4] sm:$0x1]
        %v650 = vlaneseq
        %v651 = vshrl.u32 %v650, 7
        %v652 = vsub.s32 0, %v651
        %v653 = vrot.slane %v648, %v652
        %v655 = vadd.f32 %v645, %v653
        %v656 = vtanh.pop %v655
        %vm657 = vcmask 261120
        %658 = vst.msk [vmem:[%s285] sm:$0xff] %vm657, %v656
        %vm659 = vcmask 64512
        %660 = vst.msk [vmem:[%s292] sm:$0xff] %vm659, %v405
        %s661 = sand.u32 %s163, 1
        %s662 = scalar_lea.sflag [#allocation3], %s661
        %s663 = sand.u32 %s163, 1
        %s664 = smul.addr %s663, 8
        %s665 = scalar_lea.vmem [#allocation2], %s664
        %s666 = sand.u32 %s191, 1
        %s667 = scalar_lea.sflag [#allocation5], %s666
        %s668 = sand.u32 %s191, 1
        %s669 = smul.addr %s668, 8
        %s670 = scalar_lea.vmem [#allocation4], %s669
        // Predicated region
        $region41: #{attention_forward.1} parent=39 // pred_check
          %p671 = pneg %p173
        $region42: #{attention_forward.1} parent=39 // pred_check_branch
          %673 = sbr.rel (%p671) target = $region44
        $region43: #{attention_forward.1} parent=39 // pred_region
          %s675 = ssub.s32 128, 128
          %676 = vsyncadd %s662, %s675
          %s677 = sadd.s32 %s29, %s28
          %s678 = smul.addr %s677, 128
          %s679 = scalar_lea.hbm %s5, %s678
          %s681 = sshll.u32 %s665, 4
          %s682 = int_to_ptr.vmem [resolvable:$true] %s681
          %684 = dma.vmem_to_hbm [thread:$0]  %s682, 128, %s679, %s662
        $region44: #{attention_forward.1} parent=39 // pred_fallthru
          _
        // Predicated region
        $region45: #{attention_forward.1} parent=39 // pred_check
          %p685 = pneg %p201
        $region46: #{attention_forward.1} parent=39 // pred_check_branch
          %687 = sbr.rel (%p685) target = $region48
        $region47: #{attention_forward.1} parent=39 // pred_region
          %s689 = ssub.s32 128, 128
          %690 = vsyncadd %s667, %s689
          %s691 = sadd.s32 %s29, %s28
          %s692 = smul.addr %s691, 128
          %s693 = scalar_lea.hbm %s6, %s692
          %s695 = sshll.u32 %s670, 4
          %s696 = int_to_ptr.vmem [resolvable:$true] %s695
          %698 = dma.vmem_to_hbm [thread:$0]  %s696, 128, %s693, %s667
        $region48: #{attention_forward.1} parent=39 // pred_fallthru
          _
      $region40: #{attention_forward.1} parent=5 // pred_fallthru
        _
      %p699 = scmp.le.s32.totalorder 2, %s19
      // Predicated region
      $region49: #{attention_forward.1} parent=5 // pred_check
        %p700 = pneg %p699
      $region50: #{attention_forward.1} parent=5 // pred_check_branch
        %702 = sbr.rel (%p700) target = $region52
      $region51: #{attention_forward.1} parent=5 // pred_region
        %s703 = ssub.s32 %s19, 2
        // Predicated region
        $region53: #{attention_forward.1} parent=51 // pred_check
          %p704 = pneg %p179
        $region54: #{attention_forward.1} parent=51 // pred_check_branch
          %706 = sbr.rel (%p704) target = $region56
        $region55: #{attention_forward.1} parent=51 // pred_region
          %s707 = sand.u32 %s164, 1
          %s708 = scalar_lea.sflag [#allocation3], %s707
          %s709 = sand.u32 %s164, 1
          %s710 = smul.addr %s709, 8
          %s711 = scalar_lea.vmem [#allocation2], %s710
          %712 = dma.done %s708, 128
        $region56: #{attention_forward.1} parent=51 // pred_fallthru
          _
        // Predicated region
        $region57: #{attention_forward.1} parent=51 // pred_check
          %p713 = pneg %p207
        $region58: #{attention_forward.1} parent=51 // pred_check_branch
          %715 = sbr.rel (%p713) target = $region60
        $region59: #{attention_forward.1} parent=51 // pred_region
          %s716 = sand.u32 %s192, 1
          %s717 = scalar_lea.sflag [#allocation5], %s716
          %s718 = sand.u32 %s192, 1
          %s719 = smul.addr %s718, 8
          %s720 = scalar_lea.vmem [#allocation4], %s719
          %721 = dma.done %s717, 128
        $region60: #{attention_forward.1} parent=51 // pred_fallthru
          _
      $region52: #{attention_forward.1} parent=5 // pred_fallthru
        _
    $region6: #{attention_forward.1} parent=1 // loop_footer
      %s23 = sadd.s32 1, %s19
    $region7: #{attention_forward.1} parent=1 // loop_footer_branch
      %18 = sbr.rel target = $region3
    $region8: #{attention_forward.1} parent=1 // loop_exit
      _
    %722 = vsyncpa [#allocation3], 1
    %s723 = scalar_lea.sflag [#allocation3], 1
    %724 = vsyncpa %s723, 1
    %725 = vsyncpa [#allocation5], 1
    %s726 = scalar_lea.sflag [#allocation5], 1
    %727 = vsyncpa %s726, 1

</llo_original>
